<compile_context>
chip_gen: v7x
topology: tpu7x:2x2x1
jax: 0.10.0
libtpu: 0.0.40
codegen_flags: <defaults>
</compile_context>

<pallas_src>
import numpy as np

import jax
import jax.numpy as jnp
from jax import lax
from jax.experimental import pallas as pl
from jax.experimental.pallas import tpu as pltpu


# ---------------------------------------------------------------------------
# Fused kernel (whole residual block, single grid step)
# ---------------------------------------------------------------------------
def fused_resblock_kernel(x_ref, su_ref, sd_ref,
                          w1_ref, s1_ref, b1_ref,
                          w2_ref, s2_ref, b2_ref, out_ref):
    """x_ref: (M=N*H, WC=W*C) lane-dense packed f32 input.
    su/sd: (M, M) bf16 0/1 selection matrices: (su @ h)[r] = h[r-1] and
    (sd @ h)[r] = h[r+1] within each image, with reflection at the edges.
    w*_ref: (3*WC, WC) bf16 dy-concatenated, dx-presummed conv weights with
    the column (width) reflection folded in.  s*/b*: (1, WC) packed BN affine."""
    x = x_ref[...]                       # (M, WC) f32
    su = su_ref[...]                     # (M, M)  bf16
    sd = sd_ref[...]                     # (M, M)  bf16

    def conv3x3(h, w_ref):
        hb = h.astype(jnp.bfloat16)
        # Row (height) reflection + dy=0 / dy=2 shifts as exact 0/1 selection
        # matmuls (exactly one nonzero per row -> values reproduced exactly).
        up = jnp.dot(su, hb, preferred_element_type=jnp.float32).astype(jnp.bfloat16)
        dn = jnp.dot(sd, hb, preferred_element_type=jnp.float32).astype(jnp.bfloat16)
        # dy fused along K: one (M, 3*WC) x (3*WC, WC) matmul per conv.
        hcat = jnp.concatenate([up, hb, dn], axis=-1)
        return jnp.dot(hcat, w_ref[...], preferred_element_type=jnp.float32)

    # conv1 + BN affine + ReLU   (Dropout(0.5) = identity in eval mode)
    y1 = jnp.maximum(conv3x3(x, w1_ref) * s1_ref[...] + b1_ref[...], 0.0)
    # conv2 + BN affine, then residual (skip) add -- all in VMEM / vregs.
    y2 = conv3x3(y1, w2_ref) * s2_ref[...] + b2_ref[...]
    out_ref[...] = (x + y2).astype(out_ref.dtype)


# ---------------------------------------------------------------------------
# Wrapper-side preparation
# ---------------------------------------------------------------------------
def _fold_bn(gamma, beta, mean, var, eps=1e-5):
    scale = gamma / jnp.sqrt(var + eps)
    bias = beta - mean * scale
    return scale, bias


def _pack_conv_weights(w_hwio, spatial_w, dtype=jnp.bfloat16):
    """(3,3,Cin,Cout) HWIO conv weight -> (3*W*C, W*C) matrix.

    Row block dy (stacked along K), dx column taps pre-summed and the column
    (width) reflection folded in:
      W[dy, (wi,ci), (wo,co)] = sum_dx w[dy,dx,ci,co] * [reflect(wo+dx-1)==wi]
    Multiplying [x[r-1] | x[r] | x[r+1]] (each (M, W*C), row-reflected) by it
    performs the full 3x3 conv with reflection padding."""
    C = w_hwio.shape[2]
    Wsp = spatial_w
    ind = np.zeros((3, Wsp, Wsp), np.float32)        # (dx, w_in, w_out)
    for dx in range(3):
        for wo in range(Wsp):
            wi = wo + dx - 1
            if wi < 0:
                wi = -wi                             # reflect left edge
            elif wi >= Wsp:
                wi = 2 * (Wsp - 1) - wi              # reflect right edge
            ind[dx, wi, wo] = 1.0
    ind = jnp.asarray(ind)
    # (dy, dx, w_in, ci, w_out, co); dx pre-summed in f32, single bf16 cast.
    blk = (ind[None, :, :, None, :, None] *
           w_hwio[:, :, None, :, None, :]).sum(axis=1)     # (3, W, C, W, C)
    return blk.reshape(3 * Wsp * C, Wsp * C).astype(dtype)


def _row_shift_matrices(n, h, dtype=jnp.bfloat16):
    """Per-image row shift-with-reflection as exact 0/1 selection matrices."""
    m = n * h
    su = np.zeros((m, m), np.float32)    # (su @ x)[r] = x[r-1]  (reflected)
    sd = np.zeros((m, m), np.float32)    # (sd @ x)[r] = x[r+1]  (reflected)
    for b in range(n):
        for r in range(h):
            up = r - 1 if r >= 1 else 1              # reflect top edge
            dn = r + 1 if r <= h - 2 else h - 2      # reflect bottom edge
            su[b * h + r, b * h + up] = 1.0
            sd[b * h + r, b * h + dn] = 1.0
    return jnp.asarray(su, dtype), jnp.asarray(sd, dtype)


def _pack_channel_vec(v, spatial_w):
    return jnp.tile(v, spatial_w).reshape(1, spatial_w * v.shape[0])


def residual_block(x_nchw, params):
    """Forward pass of ResidualBlock.  x_nchw: (N, C, H, W) float32."""
    N, C, H, W = x_nchw.shape
    WC = W * C
    M = N * H
    # Lane-dense packing needs W*C to fill whole 128-lane vregs; the packed
    # weights scale as (W*C)^2 -- re-derive the tiling for other shapes.
    assert WC % 128 == 0, f"W*C={WC} must be a multiple of 128 for this packing"

    # NCHW -> NHWC -> lane-dense (N*H, W*C) packing (batch folded into M).
    x = jnp.transpose(x_nchw, (0, 2, 3, 1)).reshape(M, WC)

    s1, b1 = _fold_bn(params["gamma1"], params["beta1"],
                      params["mean1"], params["var1"])
    s2, b2 = _fold_bn(params["gamma2"], params["beta2"],
                      params["mean2"], params["var2"])

    w1c = _pack_conv_weights(params["w1"], W)        # (3*WC, WC) bf16
    w2c = _pack_conv_weights(params["w2"], W)
    su, sd = _row_shift_matrices(N, H)               # (M, M) bf16
    s1p, b1p = _pack_channel_vec(s1, W), _pack_channel_vec(b1, W)
    s2p, b2p = _pack_channel_vec(s2, W), _pack_channel_vec(b2, W)

    # Advisory cost estimate: 2 fused convs + 4 tiny row-shift matmuls.
    flops = 2 * (2 * M * (3 * WC) * WC) + 4 * (2 * M * M * WC)
    bytes_accessed = (2 * M * WC) * 4 + (w1c.size + w2c.size) * 2 \
        + (su.size + sd.size) * 2 + 4 * WC * 4
    # TODO(synk): when stacking many blocks, prefetch the next block's packed
    # weights cross-call (P10) to hide the recurring weight DMA.

    out = pl.pallas_call(
        fused_resblock_kernel,
        out_shape=jax.ShapeDtypeStruct((M, WC), jnp.float32),
        grid=(1,),
        in_specs=[
            pl.BlockSpec((M, WC), lambda i: (0, 0)),        # x (packed, f32)
            pl.BlockSpec((M, M), lambda i: (0, 0)),         # row shift up
            pl.BlockSpec((M, M), lambda i: (0, 0)),         # row shift down
            pl.BlockSpec((3 * WC, WC), lambda i: (0, 0)),   # conv1 taps (bf16)
            pl.BlockSpec((1, WC), lambda i: (0, 0)),        # BN1 scale
            pl.BlockSpec((1, WC), lambda i: (0, 0)),        # BN1 bias
            pl.BlockSpec((3 * WC, WC), lambda i: (0, 0)),   # conv2 taps (bf16)
            pl.BlockSpec((1, WC), lambda i: (0, 0)),        # BN2 scale
            pl.BlockSpec((1, WC), lambda i: (0, 0)),        # BN2 bias
        ],
        out_specs=pl.BlockSpec((M, WC), lambda i: (0, 0)),
        cost_estimate=pl.CostEstimate(flops=flops, transcendentals=0,
                                      bytes_accessed=bytes_accessed),
    )(x, su, sd, w1c, s1p, b1p, w2c, s2p, b2p)

    # unpack (N*H, W*C) -> NHWC -> NCHW
    return jnp.transpose(out.reshape(N, H, W, C), (0, 3, 1, 2))


# ---------------------------------------------------------------------------
# Pure-JAX reference (for correctness check)
# ---------------------------------------------------------------------------
def residual_block_ref(x_nchw, params):
    x = jnp.transpose(x_nchw, (0, 2, 3, 1))

    def conv_bn(h, w, gamma, beta, mean, var, relu):
        hp = jnp.pad(h, ((0, 0), (1, 1), (1, 1), (0, 0)), mode="reflect")
        y = lax.conv_general_dilated(
            hp, w, window_strides=(1, 1), padding="VALID",
            dimension_numbers=("NHWC", "HWIO", "NHWC"))
        scale = gamma / jnp.sqrt(var + 1e-5)
        y = y * scale + (beta - mean * scale)
        return jnp.maximum(y, 0.0) if relu else y

    y = conv_bn(x, params["w1"], params["gamma1"], params["beta1"],
                params["mean1"], params["var1"], relu=True)
    y = conv_bn(y, params["w2"], params["gamma2"], params["beta2"],
                params["mean2"], params["var2"], relu=False)
    return jnp.transpose(x + y, (0, 3, 1, 2))


# ---------------------------------------------------------------------------
# Main
# ---------------------------------------------------------------------------
if __name__ == "__main__":
    N, C, H, W = 2, 8, 16, 16   # num_filters = 8 ; W*C = 128 = one lane row
    key = jax.random.PRNGKey(0)
    keys = jax.random.split(key, 11)

    x = jax.random.normal(keys[0], (N, C, H, W), jnp.float32)

    params = {
        # conv weights in HWIO layout (3, 3, Cin, Cout), no bias
        "w1": jax.random.normal(keys[1], (3, 3, C, C), jnp.float32) * 0.1,
        "w2": jax.random.normal(keys[2], (3, 3, C, C), jnp.float32) * 0.1,
        # BatchNorm parameters / running stats (deterministic synthetic init)
        "gamma1": jax.random.uniform(keys[3], (C,), jnp.float32, 0.5, 1.5),
        "beta1":  jax.random.normal(keys[4], (C,), jnp.float32) * 0.1,
        "mean1":  jax.random.normal(keys[5], (C,), jnp.float32) * 0.1,
        "var1":   jax.random.uniform(keys[6], (C,), jnp.float32, 0.5, 1.5),
        "gamma2": jax.random.uniform(keys[7], (C,), jnp.float32, 0.5, 1.5),
        "beta2":  jax.random.normal(keys[8], (C,), jnp.float32) * 0.1,
        "mean2":  jax.random.normal(keys[9], (C,), jnp.float32) * 0.1,
        "var2":   jax.random.uniform(keys[10], (C,), jnp.float32, 0.5, 1.5),
    }

    out = jax.block_until_ready(residual_block(x, params))
    ref = jax.block_until_ready(residual_block_ref(x, params))

    assert out.shape == (N, C, H, W), out.shape
    # MXU operands are deliberately bf16 (weights stored bf16, activations cast
    # in-kernel); the rounding compounds through both convs, so compare against
    # the full-f32 reference at a bf16-appropriate tolerance. (With f32 taps +
    # precision=HIGHEST the diff is ~1e-6, at 2x the weight DMA.)
    assert jnp.allclose(out, ref, atol=3e-2, rtol=3e-2), float(
        jnp.max(jnp.abs(out - ref)))

    print("KERNEL_OK")
</pallas_src>

<mosaic_0001>
module attributes {stable_mosaic.version = 11 : i64} {
  func.func @fused_resblock_kernel(%arg0: i32, %arg1: memref<32x128xf32, #tpu.memory_space<vmem>>, %arg2: memref<32x32xbf16, #tpu.memory_space<vmem>>, %arg3: memref<32x32xbf16, #tpu.memory_space<vmem>>, %arg4: memref<384x128xbf16, #tpu.memory_space<vmem>>, %arg5: memref<1x128xf32, #tpu.memory_space<vmem>>, %arg6: memref<1x128xf32, #tpu.memory_space<vmem>>, %arg7: memref<384x128xbf16, #tpu.memory_space<vmem>>, %arg8: memref<1x128xf32, #tpu.memory_space<vmem>>, %arg9: memref<1x128xf32, #tpu.memory_space<vmem>>, %arg10: memref<32x128xf32, #tpu.memory_space<vmem>>) attributes {dimension_semantics = [#tpu.dimension_semantics<arbitrary>], iteration_bounds = array<i64: 1>, scalar_prefetch = 0 : i64, scratch_operands = 0 : i64, tpu.core_type = #tpu.core_type<tc>, window_params = [{pipeline_mode = #tpu.pipeline_mode<synchronous>, transform_indices = @transform_0, window_bounds = array<i64: 32, 128>}, {pipeline_mode = #tpu.pipeline_mode<synchronous>, transform_indices = @transform_1, window_bounds = array<i64: 32, 32>}, {pipeline_mode = #tpu.pipeline_mode<synchronous>, transform_indices = @transform_2, window_bounds = array<i64: 32, 32>}, {pipeline_mode = #tpu.pipeline_mode<synchronous>, transform_indices = @transform_3, window_bounds = array<i64: 384, 128>}, {pipeline_mode = #tpu.pipeline_mode<synchronous>, transform_indices = @transform_4, window_bounds = array<i64: 1, 128>}, {pipeline_mode = #tpu.pipeline_mode<synchronous>, transform_indices = @transform_5, window_bounds = array<i64: 1, 128>}, {pipeline_mode = #tpu.pipeline_mode<synchronous>, transform_indices = @transform_6, window_bounds = array<i64: 384, 128>}, {pipeline_mode = #tpu.pipeline_mode<synchronous>, transform_indices = @transform_7, window_bounds = array<i64: 1, 128>}, {pipeline_mode = #tpu.pipeline_mode<synchronous>, transform_indices = @transform_8, window_bounds = array<i64: 1, 128>}, {pipeline_mode = #tpu.pipeline_mode<synchronous>, transform_indices = @transform_9, window_bounds = array<i64: 32, 128>}]} {
    %c0 = arith.constant 0 : index
    %c0_0 = arith.constant 0 : index
    %0 = vector.load %arg1[%c0, %c0_0] : memref<32x128xf32, #tpu.memory_space<vmem>>, vector<32x128xf32>
    %c0_1 = arith.constant 0 : index
    %c0_2 = arith.constant 0 : index
    %1 = vector.load %arg2[%c0_1, %c0_2] : memref<32x32xbf16, #tpu.memory_space<vmem>>, vector<32x32xbf16>
    %c0_3 = arith.constant 0 : index
    %c0_4 = arith.constant 0 : index
    %2 = vector.load %arg3[%c0_3, %c0_4] : memref<32x32xbf16, #tpu.memory_space<vmem>>, vector<32x32xbf16>
    %3 = arith.truncf %0 : vector<32x128xf32> to vector<32x128xbf16>
    %cst = arith.constant dense<0.000000e+00> : vector<32x128xf32>
    %4 = tpu.matmul %1, %3, %cst {dimension_numbers = #tpu.dot_dimension_numbers<[1], [0], [0], [1], [0, 0, 1, 1], [], []>} : vector<32x32xbf16>, vector<32x128xbf16>, vector<32x128xf32> -> vector<32x128xf32>
    %5 = arith.truncf %4 : vector<32x128xf32> to vector<32x128xbf16>
    %cst_5 = arith.constant dense<0.000000e+00> : vector<32x128xf32>
    %6 = tpu.matmul %2, %3, %cst_5 {dimension_numbers = #tpu.dot_dimension_numbers<[1], [0], [0], [1], [0, 0, 1, 1], [], []>} : vector<32x32xbf16>, vector<32x128xbf16>, vector<32x128xf32> -> vector<32x128xf32>
    %7 = arith.truncf %6 : vector<32x128xf32> to vector<32x128xbf16>
    %8 = tpu.concatenate %5, %3, %7 in 1 : vector<32x128xbf16>, vector<32x128xbf16>, vector<32x128xbf16> -> vector<32x384xbf16>
    %c0_6 = arith.constant 0 : index
    %c0_7 = arith.constant 0 : index
    %9 = vector.load %arg4[%c0_6, %c0_7] : memref<384x128xbf16, #tpu.memory_space<vmem>>, vector<384x128xbf16>
    %cst_8 = arith.constant dense<0.000000e+00> : vector<32x128xf32>
    %10 = tpu.matmul %8, %9, %cst_8 {dimension_numbers = #tpu.dot_dimension_numbers<[1], [0], [0], [1], [0, 0, 1, 1], [], []>} : vector<32x384xbf16>, vector<384x128xbf16>, vector<32x128xf32> -> vector<32x128xf32>
    %c0_9 = arith.constant 0 : index
    %c0_10 = arith.constant 0 : index
    %11 = vector.load %arg5[%c0_9, %c0_10] : memref<1x128xf32, #tpu.memory_space<vmem>>, vector<1x128xf32>
    %12 = vector.broadcast %11 : vector<1x128xf32> to vector<32x128xf32>
    %13 = arith.mulf %10, %12 : vector<32x128xf32>
    %c0_11 = arith.constant 0 : index
    %c0_12 = arith.constant 0 : index
    %14 = vector.load %arg6[%c0_11, %c0_12] : memref<1x128xf32, #tpu.memory_space<vmem>>, vector<1x128xf32>
    %15 = vector.broadcast %14 : vector<1x128xf32> to vector<32x128xf32>
    %16 = arith.addf %13, %15 : vector<32x128xf32>
    %cst_13 = arith.constant 0.000000e+00 : f32
    %17 = vector.broadcast %cst_13 : f32 to vector<32x128xf32>
    %18 = arith.maximumf %16, %17 : vector<32x128xf32>
    %19 = arith.truncf %18 : vector<32x128xf32> to vector<32x128xbf16>
    %cst_14 = arith.constant dense<0.000000e+00> : vector<32x128xf32>
    %20 = tpu.matmul %1, %19, %cst_14 {dimension_numbers = #tpu.dot_dimension_numbers<[1], [0], [0], [1], [0, 0, 1, 1], [], []>} : vector<32x32xbf16>, vector<32x128xbf16>, vector<32x128xf32> -> vector<32x128xf32>
    %21 = arith.truncf %20 : vector<32x128xf32> to vector<32x128xbf16>
    %cst_15 = arith.constant dense<0.000000e+00> : vector<32x128xf32>
    %22 = tpu.matmul %2, %19, %cst_15 {dimension_numbers = #tpu.dot_dimension_numbers<[1], [0], [0], [1], [0, 0, 1, 1], [], []>} : vector<32x32xbf16>, vector<32x128xbf16>, vector<32x128xf32> -> vector<32x128xf32>
    %23 = arith.truncf %22 : vector<32x128xf32> to vector<32x128xbf16>
    %24 = tpu.concatenate %21, %19, %23 in 1 : vector<32x128xbf16>, vector<32x128xbf16>, vector<32x128xbf16> -> vector<32x384xbf16>
    %c0_16 = arith.constant 0 : index
    %c0_17 = arith.constant 0 : index
    %25 = vector.load %arg7[%c0_16, %c0_17] : memref<384x128xbf16, #tpu.memory_space<vmem>>, vector<384x128xbf16>
    %cst_18 = arith.constant dense<0.000000e+00> : vector<32x128xf32>
    %26 = tpu.matmul %24, %25, %cst_18 {dimension_numbers = #tpu.dot_dimension_numbers<[1], [0], [0], [1], [0, 0, 1, 1], [], []>} : vector<32x384xbf16>, vector<384x128xbf16>, vector<32x128xf32> -> vector<32x128xf32>
    %c0_19 = arith.constant 0 : index
    %c0_20 = arith.constant 0 : index
    %27 = vector.load %arg8[%c0_19, %c0_20] : memref<1x128xf32, #tpu.memory_space<vmem>>, vector<1x128xf32>
    %28 = vector.broadcast %27 : vector<1x128xf32> to vector<32x128xf32>
    %29 = arith.mulf %26, %28 : vector<32x128xf32>
    %c0_21 = arith.constant 0 : index
    %c0_22 = arith.constant 0 : index
    %30 = vector.load %arg9[%c0_21, %c0_22] : memref<1x128xf32, #tpu.memory_space<vmem>>, vector<1x128xf32>
    %31 = vector.broadcast %30 : vector<1x128xf32> to vector<32x128xf32>
    %32 = arith.addf %29, %31 : vector<32x128xf32>
    %33 = arith.addf %0, %32 : vector<32x128xf32>
    %c0_23 = arith.constant 0 : index
    %c0_24 = arith.constant 0 : index
    %34 = vector.load %arg10[%c0_23, %c0_24] : memref<32x128xf32, #tpu.memory_space<vmem>>, vector<32x128xf32>
    tpu.vector_store %arg10[%c0_23, %c0_24], %33 {strides = array<i32>} : memref<32x128xf32, #tpu.memory_space<vmem>>, vector<32x128xf32>,
    return
  }
  func.func @transform_0(%arg0: i32) -> (i32, i32) {
    %c0_i32 = arith.constant 0 : i32
    %c0_i32_0 = arith.constant 0 : i32
    %c0_i32_1 = arith.constant 0 : i32
    return %c0_i32, %c0_i32_0 : i32, i32
  }
  func.func @transform_1(%arg0: i32) -> (i32, i32) {
    %c0_i32 = arith.constant 0 : i32
    %c0_i32_0 = arith.constant 0 : i32
    %c0_i32_1 = arith.constant 0 : i32
    return %c0_i32, %c0_i32_0 : i32, i32
  }
  func.func @transform_2(%arg0: i32) -> (i32, i32) {
    %c0_i32 = arith.constant 0 : i32
    %c0_i32_0 = arith.constant 0 : i32
    %c0_i32_1 = arith.constant 0 : i32
    return %c0_i32, %c0_i32_0 : i32, i32
  }
  func.func @transform_3(%arg0: i32) -> (i32, i32) {
    %c0_i32 = arith.constant 0 : i32
    %c0_i32_0 = arith.constant 0 : i32
    %c0_i32_1 = arith.constant 0 : i32
    return %c0_i32, %c0_i32_0 : i32, i32
  }
  func.func @transform_4(%arg0: i32) -> (i32, i32) {
    %c0_i32 = arith.constant 0 : i32
    %c0_i32_0 = arith.constant 0 : i32
    %c0_i32_1 = arith.constant 0 : i32
    return %c0_i32, %c0_i32_0 : i32, i32
  }
  func.func @transform_5(%arg0: i32) -> (i32, i32) {
    %c0_i32 = arith.constant 0 : i32
    %c0_i32_0 = arith.constant 0 : i32
    %c0_i32_1 = arith.constant 0 : i32
    return %c0_i32, %c0_i32_0 : i32, i32
  }
  func.func @transform_6(%arg0: i32) -> (i32, i32) {
    %c0_i32 = arith.constant 0 : i32
    %c0_i32_0 = arith.constant 0 : i32
    %c0_i32_1 = arith.constant 0 : i32
    return %c0_i32, %c0_i32_0 : i32, i32
  }
  func.func @transform_7(%arg0: i32) -> (i32, i32) {
    %c0_i32 = arith.constant 0 : i32
    %c0_i32_0 = arith.constant 0 : i32
    %c0_i32_1 = arith.constant 0 : i32
    return %c0_i32, %c0_i32_0 : i32, i32
  }
  func.func @transform_8(%arg0: i32) -> (i32, i32) {
    %c0_i32 = arith.constant 0 : i32
    %c0_i32_0 = arith.constant 0 : i32
    %c0_i32_1 = arith.constant 0 : i32
    return %c0_i32, %c0_i32_0 : i32, i32
  }
  func.func @transform_9(%arg0: i32) -> (i32, i32) {
    %c0_i32 = arith.constant 0 : i32
    %c0_i32_0 = arith.constant 0 : i32
    %c0_i32_1 = arith.constant 0 : i32
    return %c0_i32, %c0_i32_0 : i32, i32
  }
}

</mosaic_0001>

<llo_original>
// kernel: tpu_custom_call.1
$region0: #{tpu_custom_call.1}
  #allocation0 [shape = 'u32[]', space=smem, size = 0x4, offset = 0x4, fixed_abs, tag = 'smem constant byte address 0x4 - core index']
  #allocation1 [shape = 'u32[144,128]{1,0:T(1,128)}', space=vmem, size = 0x12000, scoped, tag = 'internal scratch']
  %s0 = inlined_call_operand.hbm [shape: f32[32,128], index: 0, kind: input, shape index: {}]
  %s1 = inlined_call_operand.hbm [shape: bf16[32,32], index: 1, kind: input, shape index: {}]
  %s2 = inlined_call_operand.hbm [shape: bf16[32,32], index: 2, kind: input, shape index: {}]
  %s3 = inlined_call_operand.hbm [shape: bf16[384,128], index: 3, kind: input, shape index: {}]
  %s4 = inlined_call_operand.vmem [shape: f32[1,128], index: 4, kind: input, shape index: {}]
  %s5 = inlined_call_operand.vmem [shape: f32[1,128], index: 5, kind: input, shape index: {}]
  %s6 = inlined_call_operand.hbm [shape: bf16[384,128], index: 6, kind: input, shape index: {}]
  %s7 = inlined_call_operand.vmem [shape: f32[1,128], index: 7, kind: input, shape index: {}]
  %s8 = inlined_call_operand.vmem [shape: f32[1,128], index: 8, kind: input, shape index: {}]
  %s9 = inlined_call_operand.hbm [shape: f32[32,128], index: 9, kind: output, shape index: {}]
  %s10 = sld [smem:[#allocation0]]
  $region66: #{tpu_custom_call.1} parent=0
    _
  %s12 = ssub.s32 1, %s10
  %s13 = scalar_select 0, %s12, %s10
  $region1: #{tpu_custom_call.1} parent=0
    #allocation2 [shape = 'u8[16384]{0}', space=vmem, size = 0x4000, scoped, tag = 'input window, operand 0, single buffered']
    #allocation3 [shape = 's32[1]{0}', space=sflag, size = 0x4, scoped, tag = 'scoped memory for tpu_custom_call.1']
    #allocation4 [shape = 's32[1]{0}', space=sflag, size = 0x4, scoped, tag = 'scoped memory for tpu_custom_call.1']
    #allocation5 [shape = 'u8[8192]{0}', space=vmem, size = 0x2000, scoped, tag = 'input window, operand 1, single buffered']
    #allocation6 [shape = 's32[1]{0}', space=sflag, size = 0x4, scoped, tag = 'scoped memory for tpu_custom_call.1']
    #allocation7 [shape = 'u8[8192]{0}', space=vmem, size = 0x2000, scoped, tag = 'input window, operand 2, single buffered']
    #allocation8 [shape = 'u8[98304]{0}', space=vmem, size = 0x18000, scoped, tag = 'input window, operand 3, single buffered']
    #allocation9 [shape = 's32[1]{0}', space=sflag, size = 0x4, scoped, tag = 'scoped memory for tpu_custom_call.1']
    #allocation10 [shape = 'u8[98304]{0}', space=vmem, size = 0x18000, scoped, tag = 'input window, operand 6, single buffered']
    #allocation11 [shape = 'u8[16384]{0}', space=vmem, size = 0x4000, scoped, tag = 'output window, operand 0, single buffered']
    %14 = vsyncpa [#allocation3], 0
    %15 = vsyncpa [#allocation6], 0
    %16 = vsyncpa [#allocation9], 0
    %17 = vsyncpa [#allocation4], 0
    // Predicated region
    $region2: #{tpu_custom_call.1} parent=1 // pred_check
      _
    $region3: #{tpu_custom_call.1} parent=1 // pred_check_branch
      %19 = sbr.rel (0) target = $region5
    $region4: #{tpu_custom_call.1} parent=1 // pred_region
      %s21 = ssub.s32 512, 512
      %22 = vsyncadd [#allocation3], %s21
      %s23 = sshll.u32 [#allocation2], 4
      %s24 = int_to_ptr.vmem [resolvable:$true] %s23
      %29 = dma.hbm_to_vmem [thread:$0]  %s0, 512, %s24, [#allocation3], 128, 128, 8
    $region5: #{tpu_custom_call.1} parent=1 // pred_fallthru
      _
    // Predicated region
    $region6: #{tpu_custom_call.1} parent=1 // pred_check
      _
    $region7: #{tpu_custom_call.1} parent=1 // pred_check_branch
      %31 = sbr.rel (0) target = $region9
    $region8: #{tpu_custom_call.1} parent=1 // pred_region
      %s33 = ssub.s32 256, 256
      %34 = vsyncadd [#allocation6], %s33
      %s35 = sshll.u32 [#allocation5], 4
      %s36 = int_to_ptr.vmem [resolvable:$true] %s35
      %41 = dma.hbm_to_vmem [thread:$0]  %s1, 256, %s36, [#allocation6], 64, 64, 4
    $region9: #{tpu_custom_call.1} parent=1 // pred_fallthru
      _
    // Predicated region
    $region10: #{tpu_custom_call.1} parent=1 // pred_check
      _
    $region11: #{tpu_custom_call.1} parent=1 // pred_check_branch
      %43 = sbr.rel (0) target = $region13
    $region12: #{tpu_custom_call.1} parent=1 // pred_region
      %s45 = ssub.s32 256, 256
      %46 = vsyncadd [#allocation6], %s45
      %s47 = sshll.u32 [#allocation7], 4
      %s48 = int_to_ptr.vmem [resolvable:$true] %s47
      %53 = dma.hbm_to_vmem [thread:$0]  %s2, 256, %s48, [#allocation6], 64, 64, 4
    $region13: #{tpu_custom_call.1} parent=1 // pred_fallthru
      _
    // Predicated region
    $region14: #{tpu_custom_call.1} parent=1 // pred_check
      _
    $region15: #{tpu_custom_call.1} parent=1 // pred_check_branch
      %55 = sbr.rel (0) target = $region17
    $region16: #{tpu_custom_call.1} parent=1 // pred_region
      %s57 = ssub.s32 3072, 3072
      %58 = vsyncadd [#allocation9], %s57
      %s59 = sshll.u32 [#allocation8], 4
      %s60 = int_to_ptr.vmem [resolvable:$true] %s59
      %65 = dma.hbm_to_vmem [thread:$0]  %s3, 3072, %s60, [#allocation9], 64, 64, 4
    $region17: #{tpu_custom_call.1} parent=1 // pred_fallthru
      _
    // Predicated region
    $region18: #{tpu_custom_call.1} parent=1 // pred_check
      _
    $region19: #{tpu_custom_call.1} parent=1 // pred_check_branch
      %67 = sbr.rel (0) target = $region21
    $region20: #{tpu_custom_call.1} parent=1 // pred_region
      _
    $region21: #{tpu_custom_call.1} parent=1 // pred_fallthru
      _
    // Predicated region
    $region22: #{tpu_custom_call.1} parent=1 // pred_check
      _
    $region23: #{tpu_custom_call.1} parent=1 // pred_check_branch
      %69 = sbr.rel (0) target = $region25
    $region24: #{tpu_custom_call.1} parent=1 // pred_region
      _
    $region25: #{tpu_custom_call.1} parent=1 // pred_fallthru
      _
    // Predicated region
    $region26: #{tpu_custom_call.1} parent=1 // pred_check
      _
    $region27: #{tpu_custom_call.1} parent=1 // pred_check_branch
      %71 = sbr.rel (0) target = $region29
    $region28: #{tpu_custom_call.1} parent=1 // pred_region
      %s73 = ssub.s32 3072, 3072
      %74 = vsyncadd [#allocation9], %s73
      %s75 = sshll.u32 [#allocation10], 4
      %s76 = int_to_ptr.vmem [resolvable:$true] %s75
      %81 = dma.hbm_to_vmem [thread:$0]  %s6, 3072, %s76, [#allocation9], 64, 64, 4
    $region29: #{tpu_custom_call.1} parent=1 // pred_fallthru
      _
    // Predicated region
    $region30: #{tpu_custom_call.1} parent=1 // pred_check
      _
    $region31: #{tpu_custom_call.1} parent=1 // pred_check_branch
      %83 = sbr.rel (0) target = $region33
    $region32: #{tpu_custom_call.1} parent=1 // pred_region
      _
    $region33: #{tpu_custom_call.1} parent=1 // pred_fallthru
      _
    // Predicated region
    $region34: #{tpu_custom_call.1} parent=1 // pred_check
      _
    $region35: #{tpu_custom_call.1} parent=1 // pred_check_branch
      %85 = sbr.rel (0) target = $region37
    $region36: #{tpu_custom_call.1} parent=1 // pred_region
      _
    $region37: #{tpu_custom_call.1} parent=1 // pred_fallthru
      _
    // Predicated region
    $region38: #{tpu_custom_call.1} parent=1 // pred_check
      _
    $region39: #{tpu_custom_call.1} parent=1 // pred_check_branch
      %87 = sbr.rel (0) target = $region41
    $region40: #{tpu_custom_call.1} parent=1 // pred_region
      %88 = dma.done [#allocation3], 512
    $region41: #{tpu_custom_call.1} parent=1 // pred_fallthru
      _
    // Predicated region
    $region42: #{tpu_custom_call.1} parent=1 // pred_check
      _
    $region43: #{tpu_custom_call.1} parent=1 // pred_check_branch
      %90 = sbr.rel (0) target = $region45
    $region44: #{tpu_custom_call.1} parent=1 // pred_region
      %91 = dma.done [#allocation6], 256
    $region45: #{tpu_custom_call.1} parent=1 // pred_fallthru
      _
    // Predicated region
    $region46: #{tpu_custom_call.1} parent=1 // pred_check
      _
    $region47: #{tpu_custom_call.1} parent=1 // pred_check_branch
      %93 = sbr.rel (0) target = $region49
    $region48: #{tpu_custom_call.1} parent=1 // pred_region
      %94 = dma.done [#allocation6], 256
    $region49: #{tpu_custom_call.1} parent=1 // pred_fallthru
      _
    // Predicated region
    $region50: #{tpu_custom_call.1} parent=1 // pred_check
      _
    $region51: #{tpu_custom_call.1} parent=1 // pred_check_branch
      %96 = sbr.rel (0) target = $region53
    $region52: #{tpu_custom_call.1} parent=1 // pred_region
      %97 = dma.done [#allocation9], 3072
    $region53: #{tpu_custom_call.1} parent=1 // pred_fallthru
      _
    // Predicated region
    $region54: #{tpu_custom_call.1} parent=1 // pred_check
      _
    $region55: #{tpu_custom_call.1} parent=1 // pred_check_branch
      %99 = sbr.rel (0) target = $region57
    $region56: #{tpu_custom_call.1} parent=1 // pred_region
      %100 = dma.done [#allocation9], 3072
    $region57: #{tpu_custom_call.1} parent=1 // pred_fallthru
      _
    %v102 = vld [vmem:[#allocation2] sm:$0xff]
    %v103 = vld [vmem:[#allocation2 + $0x8] sm:$0xff]
    %v104 = vld [vmem:[#allocation2 + $0x10] sm:$0xff]
    %v105 = vld [vmem:[#allocation2 + $0x18] sm:$0xff]
    %v106 = vld [vmem:[#allocation5] sm:$0xf]
    %v107 = vld [vmem:[#allocation5 + $0x4] sm:$0xf]
    %v108 = vld [vmem:[#allocation5 + $0x8] sm:$0xf]
    %v109 = vld [vmem:[#allocation5 + $0xc] sm:$0xf]
    %v110 = vld [vmem:[#allocation7] sm:$0xf]
    %v111 = vld [vmem:[#allocation7 + $0x4] sm:$0xf]
    %v112 = vld [vmem:[#allocation7 + $0x8] sm:$0xf]
    %v113 = vld [vmem:[#allocation7 + $0xc] sm:$0xf]
    %v114 = vpack.c.bf16 %v103, %v102
    %v115 = vpack.c.bf16 %v105, %v104
    %v120 = vunpack.c.l.b16 %v106
    %v121 = vunpack.c.l.b16 %v107
    %v122 = vunpack.c.l.b16 %v108
    %v123 = vunpack.c.l.b16 %v109
    %v124 = vpack.c.b16 %v121, %v120
    %v125 = vpack.c.b16 %v123, %v122
    %vm126 = vcmask 261120
    %v128 = vsel %vm126, %v124, 0
    %v131 = vsel %vm126, %v125, 0
    %133 = vmatprep.subr.bf16.mxu0 0
    %134 = vmatpush1.bf16.msra.mxu0 %v114
    %135 = vmatprep.subr.bf16.mxu0 0
    %136 = vmatpush1.bf16.msra.mxu0 %v115
    %137 = vmatprep.subr.bf16.mxu0 0
    %138 = vmatpush1.bf16.msra.mxu0 0
    %139 = vmatprep.subr.bf16.mxu0 0
    %140 = vmatpush1.bf16.msra.mxu0 0
    %141 = vmatprep.subr.bf16.mxu0 0
    %142 = vmatpush1.bf16.msra.mxu0 0
    %143 = vmatprep.subr.bf16.mxu0 0
    %144 = vmatpush1.bf16.msra.mxu0 0
    %145 = vmatprep.subr.bf16.mxu0 0
    %146 = vmatpush1.bf16.msra.mxu0 0
    %147 = vmatprep.subr.bf16.mxu0 0
    %148 = vmatpush1.bf16.msra.mxu0 0
    %149 = vmatprep.subr.bf16.mxu0 0
    %150 = vmatpush1.bf16.msra.mxu0 0
    %151 = vmatprep.subr.bf16.mxu0 0
    %152 = vmatpush1.bf16.msra.mxu0 0
    %153 = vmatprep.subr.bf16.mxu0 0
    %154 = vmatpush1.bf16.msra.mxu0 0
    %155 = vmatprep.subr.bf16.mxu0 0
    %156 = vmatpush1.bf16.msra.mxu0 0
    %157 = vmatprep.subr.bf16.mxu0 0
    %158 = vmatpush1.bf16.msra.mxu0 0
    %159 = vmatprep.subr.bf16.mxu0 0
    %160 = vmatpush1.bf16.msra.mxu0 0
    %161 = vmatprep.subr.bf16.mxu0 0
    %162 = vmatpush1.bf16.msra.mxu0 0
    %163 = vmatprep.subr.bf16.mxu0 0
    %164 = vmatpush1.bf16.msra.mxu0 0
    %165 = vmatprep.mubr.bf16.mxu0 0
    %166 = vmatmul.mubr.bf16.gmra.mrb[0].mxu0 %v128
    %v167 = vpop.f32.mrb[0].mxu0
    %v168 = vadd.f32 0.0, %v167
    %v169 = vpop.f32.mrb[0].mxu0
    %v170 = vpop.f32.mrb[0].mxu0
    %v171 = vadd.f32 0.0, %v170
    %v172 = vpop.f32.mrb[0].mxu0
    %173 = vmatprep.mubr.bf16.mxu0 0
    %174 = vmatmul.mubr.bf16.gmra.mrb[0].mxu0 %v131
    %v175 = vpop.f32.mrb[0].mxu0
    %v176 = vadd.f32 0.0, %v175
    %v177 = vpop.f32.mrb[0].mxu0
    %v178 = vpop.f32.mrb[0].mxu0
    %v179 = vadd.f32 0.0, %v178
    %v180 = vpop.f32.mrb[0].mxu0
    %181 = vdwg.mxu0
    %v182 = vpack.c.bf16 %v171, %v168
    %v183 = vpack.c.bf16 %v179, %v176
    %v188 = vunpack.c.l.b16 %v110
    %v189 = vunpack.c.l.b16 %v111
    %v190 = vunpack.c.l.b16 %v112
    %v191 = vunpack.c.l.b16 %v113
    %v192 = vpack.c.b16 %v189, %v188
    %v193 = vpack.c.b16 %v191, %v190
    %v195 = vsel %vm126, %v192, 0
    %v198 = vsel %vm126, %v193, 0
    %200 = vmatprep.subr.bf16.mxu0 0
    %201 = vmatpush1.bf16.msra.mxu0 %v114
    %202 = vmatprep.subr.bf16.mxu0 0
    %203 = vmatpush1.bf16.msra.mxu0 %v115
    %204 = vmatprep.subr.bf16.mxu0 0
    %205 = vmatpush1.bf16.msra.mxu0 0
    %206 = vmatprep.subr.bf16.mxu0 0
    %207 = vmatpush1.bf16.msra.mxu0 0
    %208 = vmatprep.subr.bf16.mxu0 0
    %209 = vmatpush1.bf16.msra.mxu0 0
    %210 = vmatprep.subr.bf16.mxu0 0
    %211 = vmatpush1.bf16.msra.mxu0 0
    %212 = vmatprep.subr.bf16.mxu0 0
    %213 = vmatpush1.bf16.msra.mxu0 0
    %214 = vmatprep.subr.bf16.mxu0 0
    %215 = vmatpush1.bf16.msra.mxu0 0
    %216 = vmatprep.subr.bf16.mxu0 0
    %217 = vmatpush1.bf16.msra.mxu0 0
    %218 = vmatprep.subr.bf16.mxu0 0
    %219 = vmatpush1.bf16.msra.mxu0 0
    %220 = vmatprep.subr.bf16.mxu0 0
    %221 = vmatpush1.bf16.msra.mxu0 0
    %222 = vmatprep.subr.bf16.mxu0 0
    %223 = vmatpush1.bf16.msra.mxu0 0
    %224 = vmatprep.subr.bf16.mxu0 0
    %225 = vmatpush1.bf16.msra.mxu0 0
    %226 = vmatprep.subr.bf16.mxu0 0
    %227 = vmatpush1.bf16.msra.mxu0 0
    %228 = vmatprep.subr.bf16.mxu0 0
    %229 = vmatpush1.bf16.msra.mxu0 0
    %230 = vmatprep.subr.bf16.mxu0 0
    %231 = vmatpush1.bf16.msra.mxu0 0
    %232 = vmatprep.mubr.bf16.mxu0 0
    %233 = vmatmul.mubr.bf16.gmra.mrb[0].mxu0 %v195
    %v234 = vpop.f32.mrb[0].mxu0
    %v235 = vadd.f32 0.0, %v234
    %v236 = vpop.f32.mrb[0].mxu0
    %v237 = vpop.f32.mrb[0].mxu0
    %v238 = vadd.f32 0.0, %v237
    %v239 = vpop.f32.mrb[0].mxu0
    %240 = vmatprep.mubr.bf16.mxu0 0
    %241 = vmatmul.mubr.bf16.gmra.mrb[0].mxu0 %v198
    %v242 = vpop.f32.mrb[0].mxu0
    %v243 = vadd.f32 0.0, %v242
    %v244 = vpop.f32.mrb[0].mxu0
    %v245 = vpop.f32.mrb[0].mxu0
    %v246 = vadd.f32 0.0, %v245
    %v247 = vpop.f32.mrb[0].mxu0
    %248 = vdwg.mxu0
    %v249 = vpack.c.bf16 %v238, %v235
    %v250 = vpack.c.bf16 %v246, %v243
    %v251 = vld [vmem:[#allocation8] sm:$0xf]
    %v252 = vld [vmem:[#allocation8 + $0x4] sm:$0xf]
    %v253 = vld [vmem:[#allocation8 + $0x8] sm:$0xf]
    %v254 = vld [vmem:[#allocation8 + $0xc] sm:$0xf]
    %v255 = vld [vmem:[#allocation8 + $0x10] sm:$0xf]
    %v256 = vld [vmem:[#allocation8 + $0x14] sm:$0xf]
    %v257 = vld [vmem:[#allocation8 + $0x18] sm:$0xf]
    %v258 = vld [vmem:[#allocation8 + $0x1c] sm:$0xf]
    %v259 = vld [vmem:[#allocation8 + $0x20] sm:$0xf]
    %v260 = vld [vmem:[#allocation8 + $0x24] sm:$0xf]
    %v261 = vld [vmem:[#allocation8 + $0x28] sm:$0xf]
    %v262 = vld [vmem:[#allocation8 + $0x2c] sm:$0xf]
    %v263 = vld [vmem:[#allocation8 + $0x30] sm:$0xf]
    %v264 = vld [vmem:[#allocation8 + $0x34] sm:$0xf]
    %v265 = vld [vmem:[#allocation8 + $0x38] sm:$0xf]
    %v266 = vld [vmem:[#allocation8 + $0x3c] sm:$0xf]
    %v267 = vld [vmem:[#allocation8 + $0x40] sm:$0xf]
    %v268 = vld [vmem:[#allocation8 + $0x44] sm:$0xf]
    %v269 = vld [vmem:[#allocation8 + $0x48] sm:$0xf]
    %v270 = vld [vmem:[#allocation8 + $0x4c] sm:$0xf]
    %v271 = vld [vmem:[#allocation8 + $0x50] sm:$0xf]
    %v272 = vld [vmem:[#allocation8 + $0x54] sm:$0xf]
    %v273 = vld [vmem:[#allocation8 + $0x58] sm:$0xf]
    %v274 = vld [vmem:[#allocation8 + $0x5c] sm:$0xf]
    %v275 = vld [vmem:[#allocation8 + $0x60] sm:$0xf]
    %v276 = vld [vmem:[#allocation8 + $0x64] sm:$0xf]
    %v277 = vld [vmem:[#allocation8 + $0x68] sm:$0xf]
    %v278 = vld [vmem:[#allocation8 + $0x6c] sm:$0xf]
    %v279 = vld [vmem:[#allocation8 + $0x70] sm:$0xf]
    %v280 = vld [vmem:[#allocation8 + $0x74] sm:$0xf]
    %v281 = vld [vmem:[#allocation8 + $0x78] sm:$0xf]
    %v282 = vld [vmem:[#allocation8 + $0x7c] sm:$0xf]
    %v283 = vld [vmem:[#allocation8 + $0x80] sm:$0xf]
    %v284 = vld [vmem:[#allocation8 + $0x84] sm:$0xf]
    %v285 = vld [vmem:[#allocation8 + $0x88] sm:$0xf]
    %v286 = vld [vmem:[#allocation8 + $0x8c] sm:$0xf]
    %v287 = vld [vmem:[#allocation8 + $0x90] sm:$0xf]
    %v288 = vld [vmem:[#allocation8 + $0x94] sm:$0xf]
    %v289 = vld [vmem:[#allocation8 + $0x98] sm:$0xf]
    %v290 = vld [vmem:[#allocation8 + $0x9c] sm:$0xf]
    %v291 = vld [vmem:[#allocation8 + $0xa0] sm:$0xf]
    %v292 = vld [vmem:[#allocation8 + $0xa4] sm:$0xf]
    %v293 = vld [vmem:[#allocation8 + $0xa8] sm:$0xf]
    %v294 = vld [vmem:[#allocation8 + $0xac] sm:$0xf]
    %v295 = vld [vmem:[#allocation8 + $0xb0] sm:$0xf]
    %v296 = vld [vmem:[#allocation8 + $0xb4] sm:$0xf]
    %v297 = vld [vmem:[#allocation8 + $0xb8] sm:$0xf]
    %v298 = vld [vmem:[#allocation8 + $0xbc] sm:$0xf]
    %v347 = vunpack.c.l.b16 %v251
    %v348 = vunpack.c.l.b16 %v252
    %v349 = vunpack.c.l.b16 %v253
    %v350 = vunpack.c.l.b16 %v254
    %v351 = vunpack.c.l.b16 %v255
    %v352 = vunpack.c.l.b16 %v256
    %v353 = vunpack.c.l.b16 %v257
    %v354 = vunpack.c.l.b16 %v258
    %v355 = vunpack.c.l.b16 %v259
    %v356 = vunpack.c.l.b16 %v260
    %v357 = vunpack.c.l.b16 %v261
    %v358 = vunpack.c.l.b16 %v262
    %v359 = vunpack.c.l.b16 %v263
    %v360 = vunpack.c.l.b16 %v264
    %v361 = vunpack.c.l.b16 %v265
    %v362 = vunpack.c.l.b16 %v266
    %v363 = vunpack.c.l.b16 %v267
    %v364 = vunpack.c.l.b16 %v268
    %v365 = vunpack.c.l.b16 %v269
    %v366 = vunpack.c.l.b16 %v270
    %v367 = vunpack.c.l.b16 %v271
    %v368 = vunpack.c.l.b16 %v272
    %v369 = vunpack.c.l.b16 %v273
    %v370 = vunpack.c.l.b16 %v274
    %v371 = vunpack.c.l.b16 %v275
    %v372 = vunpack.c.l.b16 %v276
    %v373 = vunpack.c.l.b16 %v277
    %v374 = vunpack.c.l.b16 %v278
    %v375 = vunpack.c.l.b16 %v279
    %v376 = vunpack.c.l.b16 %v280
    %v377 = vunpack.c.l.b16 %v281
    %v378 = vunpack.c.l.b16 %v282
    %v379 = vunpack.c.l.b16 %v283
    %v380 = vunpack.c.l.b16 %v284
    %v381 = vunpack.c.l.b16 %v285
    %v382 = vunpack.c.l.b16 %v286
    %v383 = vunpack.c.l.b16 %v287
    %v384 = vunpack.c.l.b16 %v288
    %v385 = vunpack.c.l.b16 %v289
    %v386 = vunpack.c.l.b16 %v290
    %v387 = vunpack.c.l.b16 %v291
    %v388 = vunpack.c.l.b16 %v292
    %v389 = vunpack.c.l.b16 %v293
    %v390 = vunpack.c.l.b16 %v294
    %v391 = vunpack.c.l.b16 %v295
    %v392 = vunpack.c.l.b16 %v296
    %v393 = vunpack.c.l.b16 %v297
    %v394 = vunpack.c.l.b16 %v298
    %v395 = vpack.c.b16 %v348, %v347
    %v396 = vpack.c.b16 %v350, %v349
    %v397 = vpack.c.b16 %v352, %v351
    %v398 = vpack.c.b16 %v354, %v353
    %v399 = vpack.c.b16 %v356, %v355
    %v400 = vpack.c.b16 %v358, %v357
    %v401 = vpack.c.b16 %v360, %v359
    %v402 = vpack.c.b16 %v362, %v361
    %v403 = vpack.c.b16 %v364, %v363
    %v404 = vpack.c.b16 %v366, %v365
    %v405 = vpack.c.b16 %v368, %v367
    %v406 = vpack.c.b16 %v370, %v369
    %v407 = vpack.c.b16 %v372, %v371
    %v408 = vpack.c.b16 %v374, %v373
    %v409 = vpack.c.b16 %v376, %v375
    %v410 = vpack.c.b16 %v378, %v377
    %v411 = vpack.c.b16 %v380, %v379
    %v412 = vpack.c.b16 %v382, %v381
    %v413 = vpack.c.b16 %v384, %v383
    %v414 = vpack.c.b16 %v386, %v385
    %v415 = vpack.c.b16 %v388, %v387
    %v416 = vpack.c.b16 %v390, %v389
    %v417 = vpack.c.b16 %v392, %v391
    %v418 = vpack.c.b16 %v394, %v393
    %443 = vmatprep.subr.bf16.mxu0 0
    %444 = vmatpush1.bf16.msra.mxu0 %v395
    %445 = vmatprep.subr.bf16.mxu0 0
    %446 = vmatpush1.bf16.msra.mxu0 %v396
    %447 = vmatprep.subr.bf16.mxu0 0
    %448 = vmatpush1.bf16.msra.mxu0 %v397
    %449 = vmatprep.subr.bf16.mxu0 0
    %450 = vmatpush1.bf16.msra.mxu0 %v398
    %451 = vmatprep.subr.bf16.mxu0 0
    %452 = vmatpush1.bf16.msra.mxu0 %v399
    %453 = vmatprep.subr.bf16.mxu0 0
    %454 = vmatpush1.bf16.msra.mxu0 %v400
    %455 = vmatprep.subr.bf16.mxu0 0
    %456 = vmatpush1.bf16.msra.mxu0 %v401
    %457 = vmatprep.subr.bf16.mxu0 0
    %458 = vmatpush1.bf16.msra.mxu0 %v402
    %459 = vmatprep.subr.bf16.mxu0 0
    %460 = vmatpush1.bf16.msra.mxu0 %v403
    %461 = vmatprep.subr.bf16.mxu0 0
    %462 = vmatpush1.bf16.msra.mxu0 %v404
    %463 = vmatprep.subr.bf16.mxu0 0
    %464 = vmatpush1.bf16.msra.mxu0 %v405
    %465 = vmatprep.subr.bf16.mxu0 0
    %466 = vmatpush1.bf16.msra.mxu0 %v406
    %467 = vmatprep.subr.bf16.mxu0 0
    %468 = vmatpush1.bf16.msra.mxu0 %v407
    %469 = vmatprep.subr.bf16.mxu0 0
    %470 = vmatpush1.bf16.msra.mxu0 %v408
    %471 = vmatprep.subr.bf16.mxu0 0
    %472 = vmatpush1.bf16.msra.mxu0 %v409
    %473 = vmatprep.subr.bf16.mxu0 0
    %474 = vmatpush1.bf16.msra.mxu0 %v410
    %475 = vmatprep.mubr.bf16.mxu0 %v114
    %476 = vmatmul.mubr.bf16.gmra.mrb[0].mxu0 %v182
    %v477 = vpop.f32.mrb[0].mxu0
    %v478 = vadd.f32 0.0, %v477
    %v479 = vpop.f32.mrb[0].mxu0
    %v480 = vpop.f32.mrb[0].mxu0
    %v481 = vadd.f32 0.0, %v480
    %v482 = vpop.f32.mrb[0].mxu0
    %483 = vmatprep.mubr.bf16.mxu0 %v115
    %484 = vmatmul.mubr.bf16.gmra.mrb[0].mxu0 %v183
    %v485 = vpop.f32.mrb[0].mxu0
    %v486 = vadd.f32 0.0, %v485
    %v487 = vpop.f32.mrb[0].mxu0
    %v488 = vpop.f32.mrb[0].mxu0
    %v489 = vadd.f32 0.0, %v488
    %v490 = vpop.f32.mrb[0].mxu0
    %491 = vdwg.mxu0
    %492 = vmatprep.subr.bf16.mxu0 0
    %493 = vmatpush1.bf16.msra.mxu0 %v411
    %494 = vmatprep.subr.bf16.mxu0 0
    %495 = vmatpush1.bf16.msra.mxu0 %v412
    %496 = vmatprep.subr.bf16.mxu0 0
    %497 = vmatpush1.bf16.msra.mxu0 %v413
    %498 = vmatprep.subr.bf16.mxu0 0
    %499 = vmatpush1.bf16.msra.mxu0 %v414
    %500 = vmatprep.subr.bf16.mxu0 0
    %501 = vmatpush1.bf16.msra.mxu0 %v415
    %502 = vmatprep.subr.bf16.mxu0 0
    %503 = vmatpush1.bf16.msra.mxu0 %v416
    %504 = vmatprep.subr.bf16.mxu0 0
    %505 = vmatpush1.bf16.msra.mxu0 %v417
    %506 = vmatprep.subr.bf16.mxu0 0
    %507 = vmatpush1.bf16.msra.mxu0 %v418
    %508 = vmatprep.subr.bf16.mxu0 0
    %509 = vmatpush1.bf16.msra.mxu0 0
    %510 = vmatprep.subr.bf16.mxu0 0
    %511 = vmatpush1.bf16.msra.mxu0 0
    %512 = vmatprep.subr.bf16.mxu0 0
    %513 = vmatpush1.bf16.msra.mxu0 0
    %514 = vmatprep.subr.bf16.mxu0 0
    %515 = vmatpush1.bf16.msra.mxu0 0
    %516 = vmatprep.subr.bf16.mxu0 0
    %517 = vmatpush1.bf16.msra.mxu0 0
    %518 = vmatprep.subr.bf16.mxu0 0
    %519 = vmatpush1.bf16.msra.mxu0 0
    %520 = vmatprep.subr.bf16.mxu0 0
    %521 = vmatpush1.bf16.msra.mxu0 0
    %522 = vmatprep.subr.bf16.mxu0 0
    %523 = vmatpush1.bf16.msra.mxu0 0
    %524 = vmatprep.mubr.bf16.mxu0 0
    %525 = vmatmul.mubr.bf16.gmra.mrb[0].mxu0 %v249
    %v526 = vpop.f32.mrb[0].mxu0
    %v527 = vadd.f32 %v478, %v526
    %v528 = vpop.f32.mrb[0].mxu0
    %v529 = vpop.f32.mrb[0].mxu0
    %v530 = vadd.f32 %v481, %v529
    %v531 = vpop.f32.mrb[0].mxu0
    %532 = vmatprep.mubr.bf16.mxu0 0
    %533 = vmatmul.mubr.bf16.gmra.mrb[0].mxu0 %v250
    %v534 = vpop.f32.mrb[0].mxu0
    %v535 = vadd.f32 %v486, %v534
    %v536 = vpop.f32.mrb[0].mxu0
    %v537 = vpop.f32.mrb[0].mxu0
    %v538 = vadd.f32 %v489, %v537
    %v539 = vpop.f32.mrb[0].mxu0
    %540 = vdwg.mxu0
    %v541 = vld [vmem:[%s4] sm:$0x1]
    %v543 = vlaneseq
    %v544 = vshrl.u32 %v543, 7
    %v545 = vsub.s32 0, %v544
    %v546 = vrot.slane %v541, %v545
    %v548 = vmul.f32 %v527, %v546
    %v549 = vmul.f32 %v530, %v546
    %v550 = vmul.f32 %v535, %v546
    %v551 = vmul.f32 %v538, %v546
    %v552 = vld [vmem:[%s5] sm:$0x1]
    %v554 = vlaneseq
    %v555 = vshrl.u32 %v554, 7
    %v556 = vsub.s32 0, %v555
    %v557 = vrot.slane %v552, %v556
    %v559 = vadd.f32 %v548, %v557
    %v560 = vadd.f32 %v549, %v557
    %v561 = vadd.f32 %v550, %v557
    %v562 = vadd.f32 %v551, %v557
    %v563 = vmax.f32 %v559, 0.0
    %v564 = vmax.f32 %v560, 0.0
    %v565 = vmax.f32 %v561, 0.0
    %v566 = vmax.f32 %v562, 0.0
    %v567 = vpack.c.bf16 %v564, %v563
    %v568 = vpack.c.bf16 %v566, %v565
    %569 = vmatprep.subr.bf16.mxu0 0
    %570 = vmatpush1.bf16.msra.mxu0 %v567
    %571 = vmatprep.subr.bf16.mxu0 0
    %572 = vmatpush1.bf16.msra.mxu0 %v568
    %573 = vmatprep.subr.bf16.mxu0 0
    %574 = vmatpush1.bf16.msra.mxu0 0
    %575 = vmatprep.subr.bf16.mxu0 0
    %576 = vmatpush1.bf16.msra.mxu0 0
    %577 = vmatprep.subr.bf16.mxu0 0
    %578 = vmatpush1.bf16.msra.mxu0 0
    %579 = vmatprep.subr.bf16.mxu0 0
    %580 = vmatpush1.bf16.msra.mxu0 0
    %581 = vmatprep.subr.bf16.mxu0 0
    %582 = vmatpush1.bf16.msra.mxu0 0
    %583 = vmatprep.subr.bf16.mxu0 0
    %584 = vmatpush1.bf16.msra.mxu0 0
    %585 = vmatprep.subr.bf16.mxu0 0
    %586 = vmatpush1.bf16.msra.mxu0 0
    %587 = vmatprep.subr.bf16.mxu0 0
    %588 = vmatpush1.bf16.msra.mxu0 0
    %589 = vmatprep.subr.bf16.mxu0 0
    %590 = vmatpush1.bf16.msra.mxu0 0
    %591 = vmatprep.subr.bf16.mxu0 0
    %592 = vmatpush1.bf16.msra.mxu0 0
    %593 = vmatprep.subr.bf16.mxu0 0
    %594 = vmatpush1.bf16.msra.mxu0 0
    %595 = vmatprep.subr.bf16.mxu0 0
    %596 = vmatpush1.bf16.msra.mxu0 0
    %597 = vmatprep.subr.bf16.mxu0 0
    %598 = vmatpush1.bf16.msra.mxu0 0
    %599 = vmatprep.subr.bf16.mxu0 0
    %600 = vmatpush1.bf16.msra.mxu0 0
    %601 = vmatprep.mubr.bf16.mxu0 0
    %602 = vmatmul.mubr.bf16.gmra.mrb[0].mxu0 %v128
    %v603 = vpop.f32.mrb[0].mxu0
    %v604 = vadd.f32 0.0, %v603
    %v605 = vpop.f32.mrb[0].mxu0
    %v606 = vpop.f32.mrb[0].mxu0
    %v607 = vadd.f32 0.0, %v606
    %v608 = vpop.f32.mrb[0].mxu0
    %609 = vmatprep.mubr.bf16.mxu0 0
    %610 = vmatmul.mubr.bf16.gmra.mrb[0].mxu0 %v131
    %v611 = vpop.f32.mrb[0].mxu0
    %v612 = vadd.f32 0.0, %v611
    %v613 = vpop.f32.mrb[0].mxu0
    %v614 = vpop.f32.mrb[0].mxu0
    %v615 = vadd.f32 0.0, %v614
    %v616 = vpop.f32.mrb[0].mxu0
    %617 = vdwg.mxu0
    %v618 = vpack.c.bf16 %v607, %v604
    %v619 = vpack.c.bf16 %v615, %v612
    %620 = vmatprep.subr.bf16.mxu0 0
    %621 = vmatpush1.bf16.msra.mxu0 %v567
    %622 = vmatprep.subr.bf16.mxu0 0
    %623 = vmatpush1.bf16.msra.mxu0 %v568
    %624 = vmatprep.subr.bf16.mxu0 0
    %625 = vmatpush1.bf16.msra.mxu0 0
    %626 = vmatprep.subr.bf16.mxu0 0
    %627 = vmatpush1.bf16.msra.mxu0 0
    %628 = vmatprep.subr.bf16.mxu0 0
    %629 = vmatpush1.bf16.msra.mxu0 0
    %630 = vmatprep.subr.bf16.mxu0 0
    %631 = vmatpush1.bf16.msra.mxu0 0
    %632 = vmatprep.subr.bf16.mxu0 0
    %633 = vmatpush1.bf16.msra.mxu0 0
    %634 = vmatprep.subr.bf16.mxu0 0
    %635 = vmatpush1.bf16.msra.mxu0 0
    %636 = vmatprep.subr.bf16.mxu0 0
    %637 = vmatpush1.bf16.msra.mxu0 0
    %638 = vmatprep.subr.bf16.mxu0 0
    %639 = vmatpush1.bf16.msra.mxu0 0
    %640 = vmatprep.subr.bf16.mxu0 0
    %641 = vmatpush1.bf16.msra.mxu0 0
    %642 = vmatprep.subr.bf16.mxu0 0
    %643 = vmatpush1.bf16.msra.mxu0 0
    %644 = vmatprep.subr.bf16.mxu0 0
    %645 = vmatpush1.bf16.msra.mxu0 0
    %646 = vmatprep.subr.bf16.mxu0 0
    %647 = vmatpush1.bf16.msra.mxu0 0
    %648 = vmatprep.subr.bf16.mxu0 0
    %649 = vmatpush1.bf16.msra.mxu0 0
    %650 = vmatprep.subr.bf16.mxu0 0
    %651 = vmatpush1.bf16.msra.mxu0 0
    %652 = vmatprep.mubr.bf16.mxu0 0
    %653 = vmatmul.mubr.bf16.gmra.mrb[0].mxu0 %v195
    %v654 = vpop.f32.mrb[0].mxu0
    %v655 = vadd.f32 0.0, %v654
    %v656 = vpop.f32.mrb[0].mxu0
    %v657 = vpop.f32.mrb[0].mxu0
    %v658 = vadd.f32 0.0, %v657
    %v659 = vpop.f32.mrb[0].mxu0
    %660 = vmatprep.mubr.bf16.mxu0 0
    %661 = vmatmul.mubr.bf16.gmra.mrb[0].mxu0 %v198
    %v662 = vpop.f32.mrb[0].mxu0
    %v663 = vadd.f32 0.0, %v662
    %v664 = vpop.f32.mrb[0].mxu0
    %v665 = vpop.f32.mrb[0].mxu0
    %v666 = vadd.f32 0.0, %v665
    %v667 = vpop.f32.mrb[0].mxu0
    %668 = vdwg.mxu0
    %v669 = vpack.c.bf16 %v658, %v655
    %v670 = vpack.c.bf16 %v666, %v663
    %v671 = vld [vmem:[#allocation10] sm:$0xf]
    %v672 = vld [vmem:[#allocation10 + $0x4] sm:$0xf]
    %v673 = vld [vmem:[#allocation10 + $0x8] sm:$0xf]
    %v674 = vld [vmem:[#allocation10 + $0xc] sm:$0xf]
    %v675 = vld [vmem:[#allocation10 + $0x10] sm:$0xf]
    %v676 = vld [vmem:[#allocation10 + $0x14] sm:$0xf]
    %v677 = vld [vmem:[#allocation10 + $0x18] sm:$0xf]
    %v678 = vld [vmem:[#allocation10 + $0x1c] sm:$0xf]
    %v679 = vld [vmem:[#allocation10 + $0x20] sm:$0xf]
    %v680 = vld [vmem:[#allocation10 + $0x24] sm:$0xf]
    %v681 = vld [vmem:[#allocation10 + $0x28] sm:$0xf]
    %v682 = vld [vmem:[#allocation10 + $0x2c] sm:$0xf]
    %v683 = vld [vmem:[#allocation10 + $0x30] sm:$0xf]
    %v684 = vld [vmem:[#allocation10 + $0x34] sm:$0xf]
    %v685 = vld [vmem:[#allocation10 + $0x38] sm:$0xf]
    %v686 = vld [vmem:[#allocation10 + $0x3c] sm:$0xf]
    %v687 = vld [vmem:[#allocation10 + $0x40] sm:$0xf]
    %v688 = vld [vmem:[#allocation10 + $0x44] sm:$0xf]
    %v689 = vld [vmem:[#allocation10 + $0x48] sm:$0xf]
    %v690 = vld [vmem:[#allocation10 + $0x4c] sm:$0xf]
    %v691 = vld [vmem:[#allocation10 + $0x50] sm:$0xf]
    %v692 = vld [vmem:[#allocation10 + $0x54] sm:$0xf]
    %v693 = vld [vmem:[#allocation10 + $0x58] sm:$0xf]
    %v694 = vld [vmem:[#allocation10 + $0x5c] sm:$0xf]
    %v695 = vld [vmem:[#allocation10 + $0x60] sm:$0xf]
    %v696 = vld [vmem:[#allocation10 + $0x64] sm:$0xf]
    %v697 = vld [vmem:[#allocation10 + $0x68] sm:$0xf]
    %v698 = vld [vmem:[#allocation10 + $0x6c] sm:$0xf]
    %v699 = vld [vmem:[#allocation10 + $0x70] sm:$0xf]
    %v700 = vld [vmem:[#allocation10 + $0x74] sm:$0xf]
    %v701 = vld [vmem:[#allocation10 + $0x78] sm:$0xf]
    %v702 = vld [vmem:[#allocation10 + $0x7c] sm:$0xf]
    %v703 = vld [vmem:[#allocation10 + $0x80] sm:$0xf]
    %v704 = vld [vmem:[#allocation10 + $0x84] sm:$0xf]
    %v705 = vld [vmem:[#allocation10 + $0x88] sm:$0xf]
    %v706 = vld [vmem:[#allocation10 + $0x8c] sm:$0xf]
    %v707 = vld [vmem:[#allocation10 + $0x90] sm:$0xf]
    %v708 = vld [vmem:[#allocation10 + $0x94] sm:$0xf]
    %v709 = vld [vmem:[#allocation10 + $0x98] sm:$0xf]
    %v710 = vld [vmem:[#allocation10 + $0x9c] sm:$0xf]
    %v711 = vld [vmem:[#allocation10 + $0xa0] sm:$0xf]
    %v712 = vld [vmem:[#allocation10 + $0xa4] sm:$0xf]
    %v713 = vld [vmem:[#allocation10 + $0xa8] sm:$0xf]
    %v714 = vld [vmem:[#allocation10 + $0xac] sm:$0xf]
    %v715 = vld [vmem:[#allocation10 + $0xb0] sm:$0xf]
    %v716 = vld [vmem:[#allocation10 + $0xb4] sm:$0xf]
    %v717 = vld [vmem:[#allocation10 + $0xb8] sm:$0xf]
    %v718 = vld [vmem:[#allocation10 + $0xbc] sm:$0xf]
    %v767 = vunpack.c.l.b16 %v671
    %v768 = vunpack.c.l.b16 %v672
    %v769 = vunpack.c.l.b16 %v673
    %v770 = vunpack.c.l.b16 %v674
    %v771 = vunpack.c.l.b16 %v675
    %v772 = vunpack.c.l.b16 %v676
    %v773 = vunpack.c.l.b16 %v677
    %v774 = vunpack.c.l.b16 %v678
    %v775 = vunpack.c.l.b16 %v679
    %v776 = vunpack.c.l.b16 %v680
    %v777 = vunpack.c.l.b16 %v681
    %v778 = vunpack.c.l.b16 %v682
    %v779 = vunpack.c.l.b16 %v683
    %v780 = vunpack.c.l.b16 %v684
    %v781 = vunpack.c.l.b16 %v685
    %v782 = vunpack.c.l.b16 %v686
    %v783 = vunpack.c.l.b16 %v687
    %v784 = vunpack.c.l.b16 %v688
    %v785 = vunpack.c.l.b16 %v689
    %v786 = vunpack.c.l.b16 %v690
    %v787 = vunpack.c.l.b16 %v691
    %v788 = vunpack.c.l.b16 %v692
    %v789 = vunpack.c.l.b16 %v693
    %v790 = vunpack.c.l.b16 %v694
    %v791 = vunpack.c.l.b16 %v695
    %v792 = vunpack.c.l.b16 %v696
    %v793 = vunpack.c.l.b16 %v697
    %v794 = vunpack.c.l.b16 %v698
    %v795 = vunpack.c.l.b16 %v699
    %v796 = vunpack.c.l.b16 %v700
    %v797 = vunpack.c.l.b16 %v701
    %v798 = vunpack.c.l.b16 %v702
    %v799 = vunpack.c.l.b16 %v703
    %v800 = vunpack.c.l.b16 %v704
    %v801 = vunpack.c.l.b16 %v705
    %v802 = vunpack.c.l.b16 %v706
    %v803 = vunpack.c.l.b16 %v707
    %v804 = vunpack.c.l.b16 %v708
    %v805 = vunpack.c.l.b16 %v709
    %v806 = vunpack.c.l.b16 %v710
    %v807 = vunpack.c.l.b16 %v711
    %v808 = vunpack.c.l.b16 %v712
    %v809 = vunpack.c.l.b16 %v713
    %v810 = vunpack.c.l.b16 %v714
    %v811 = vunpack.c.l.b16 %v715
    %v812 = vunpack.c.l.b16 %v716
    %v813 = vunpack.c.l.b16 %v717
    %v814 = vunpack.c.l.b16 %v718
    %v815 = vpack.c.b16 %v768, %v767
    %v816 = vpack.c.b16 %v770, %v769
    %v817 = vpack.c.b16 %v772, %v771
    %v818 = vpack.c.b16 %v774, %v773
    %v819 = vpack.c.b16 %v776, %v775
    %v820 = vpack.c.b16 %v778, %v777
    %v821 = vpack.c.b16 %v780, %v779
    %v822 = vpack.c.b16 %v782, %v781
    %v823 = vpack.c.b16 %v784, %v783
    %v824 = vpack.c.b16 %v786, %v785
    %v825 = vpack.c.b16 %v788, %v787
    %v826 = vpack.c.b16 %v790, %v789
    %v827 = vpack.c.b16 %v792, %v791
    %v828 = vpack.c.b16 %v794, %v793
    %v829 = vpack.c.b16 %v796, %v795
    %v830 = vpack.c.b16 %v798, %v797
    %v831 = vpack.c.b16 %v800, %v799
    %v832 = vpack.c.b16 %v802, %v801
    %v833 = vpack.c.b16 %v804, %v803
    %v834 = vpack.c.b16 %v806, %v805
    %v835 = vpack.c.b16 %v808, %v807
    %v836 = vpack.c.b16 %v810, %v809
    %v837 = vpack.c.b16 %v812, %v811
    %v838 = vpack.c.b16 %v814, %v813
    %863 = vmatprep.subr.bf16.mxu0 0
    %864 = vmatpush1.bf16.msra.mxu0 %v815
    %865 = vmatprep.subr.bf16.mxu0 0
    %866 = vmatpush1.bf16.msra.mxu0 %v816
    %867 = vmatprep.subr.bf16.mxu0 0
    %868 = vmatpush1.bf16.msra.mxu0 %v817
    %869 = vmatprep.subr.bf16.mxu0 0
    %870 = vmatpush1.bf16.msra.mxu0 %v818
    %871 = vmatprep.subr.bf16.mxu0 0
    %872 = vmatpush1.bf16.msra.mxu0 %v819
    %873 = vmatprep.subr.bf16.mxu0 0
    %874 = vmatpush1.bf16.msra.mxu0 %v820
    %875 = vmatprep.subr.bf16.mxu0 0
    %876 = vmatpush1.bf16.msra.mxu0 %v821
    %877 = vmatprep.subr.bf16.mxu0 0
    %878 = vmatpush1.bf16.msra.mxu0 %v822
    %879 = vmatprep.subr.bf16.mxu0 0
    %880 = vmatpush1.bf16.msra.mxu0 %v823
    %881 = vmatprep.subr.bf16.mxu0 0
    %882 = vmatpush1.bf16.msra.mxu0 %v824
    %883 = vmatprep.subr.bf16.mxu0 0
    %884 = vmatpush1.bf16.msra.mxu0 %v825
    %885 = vmatprep.subr.bf16.mxu0 0
    %886 = vmatpush1.bf16.msra.mxu0 %v826
    %887 = vmatprep.subr.bf16.mxu0 0
    %888 = vmatpush1.bf16.msra.mxu0 %v827
    %889 = vmatprep.subr.bf16.mxu0 0
    %890 = vmatpush1.bf16.msra.mxu0 %v828
    %891 = vmatprep.subr.bf16.mxu0 0
    %892 = vmatpush1.bf16.msra.mxu0 %v829
    %893 = vmatprep.subr.bf16.mxu0 0
    %894 = vmatpush1.bf16.msra.mxu0 %v830
    %895 = vmatprep.mubr.bf16.mxu0 %v567
    %896 = vmatmul.mubr.bf16.gmra.mrb[0].mxu0 %v618
    %v897 = vpop.f32.mrb[0].mxu0
    %v898 = vadd.f32 0.0, %v897
    %v899 = vpop.f32.mrb[0].mxu0
    %v900 = vpop.f32.mrb[0].mxu0
    %v901 = vadd.f32 0.0, %v900
    %v902 = vpop.f32.mrb[0].mxu0
    %903 = vmatprep.mubr.bf16.mxu0 %v568
    %904 = vmatmul.mubr.bf16.gmra.mrb[0].mxu0 %v619
    %v905 = vpop.f32.mrb[0].mxu0
    %v906 = vadd.f32 0.0, %v905
    %v907 = vpop.f32.mrb[0].mxu0
    %v908 = vpop.f32.mrb[0].mxu0
    %v909 = vadd.f32 0.0, %v908
    %v910 = vpop.f32.mrb[0].mxu0
    %911 = vdwg.mxu0
    %912 = vmatprep.subr.bf16.mxu0 0
    %913 = vmatpush1.bf16.msra.mxu0 %v831
    %914 = vmatprep.subr.bf16.mxu0 0
    %915 = vmatpush1.bf16.msra.mxu0 %v832
    %916 = vmatprep.subr.bf16.mxu0 0
    %917 = vmatpush1.bf16.msra.mxu0 %v833
    %918 = vmatprep.subr.bf16.mxu0 0
    %919 = vmatpush1.bf16.msra.mxu0 %v834
    %920 = vmatprep.subr.bf16.mxu0 0
    %921 = vmatpush1.bf16.msra.mxu0 %v835
    %922 = vmatprep.subr.bf16.mxu0 0
    %923 = vmatpush1.bf16.msra.mxu0 %v836
    %924 = vmatprep.subr.bf16.mxu0 0
    %925 = vmatpush1.bf16.msra.mxu0 %v837
    %926 = vmatprep.subr.bf16.mxu0 0
    %927 = vmatpush1.bf16.msra.mxu0 %v838
    %928 = vmatprep.subr.bf16.mxu0 0
    %929 = vmatpush1.bf16.msra.mxu0 0
    %930 = vmatprep.subr.bf16.mxu0 0
    %931 = vmatpush1.bf16.msra.mxu0 0
    %932 = vmatprep.subr.bf16.mxu0 0
    %933 = vmatpush1.bf16.msra.mxu0 0
    %934 = vmatprep.subr.bf16.mxu0 0
    %935 = vmatpush1.bf16.msra.mxu0 0
    %936 = vmatprep.subr.bf16.mxu0 0
    %937 = vmatpush1.bf16.msra.mxu0 0
    %938 = vmatprep.subr.bf16.mxu0 0
    %939 = vmatpush1.bf16.msra.mxu0 0
    %940 = vmatprep.subr.bf16.mxu0 0
    %941 = vmatpush1.bf16.msra.mxu0 0
    %942 = vmatprep.subr.bf16.mxu0 0
    %943 = vmatpush1.bf16.msra.mxu0 0
    %944 = vmatprep.mubr.bf16.mxu0 0
    %945 = vmatmul.mubr.bf16.gmra.mrb[0].mxu0 %v669
    %v946 = vpop.f32.mrb[0].mxu0
    %v947 = vadd.f32 %v898, %v946
    %v948 = vpop.f32.mrb[0].mxu0
    %v949 = vpop.f32.mrb[0].mxu0
    %v950 = vadd.f32 %v901, %v949
    %v951 = vpop.f32.mrb[0].mxu0
    %952 = vmatprep.mubr.bf16.mxu0 0
    %953 = vmatmul.mubr.bf16.gmra.mrb[0].mxu0 %v670
    %v954 = vpop.f32.mrb[0].mxu0
    %v955 = vadd.f32 %v906, %v954
    %v956 = vpop.f32.mrb[0].mxu0
    %v957 = vpop.f32.mrb[0].mxu0
    %v958 = vadd.f32 %v909, %v957
    %v959 = vpop.f32.mrb[0].mxu0
    %960 = vdwg.mxu0
    %v961 = vld [vmem:[%s7] sm:$0x1]
    %v963 = vlaneseq
    %v964 = vshrl.u32 %v963, 7
    %v965 = vsub.s32 0, %v964
    %v966 = vrot.slane %v961, %v965
    %v968 = vmul.f32 %v947, %v966
    %v969 = vmul.f32 %v950, %v966
    %v970 = vmul.f32 %v955, %v966
    %v971 = vmul.f32 %v958, %v966
    %v972 = vld [vmem:[%s8] sm:$0x1]
    %v974 = vlaneseq
    %v975 = vshrl.u32 %v974, 7
    %v976 = vsub.s32 0, %v975
    %v977 = vrot.slane %v972, %v976
    %v979 = vadd.f32 %v968, %v977
    %v980 = vadd.f32 %v969, %v977
    %v981 = vadd.f32 %v970, %v977
    %v982 = vadd.f32 %v971, %v977
    %v983 = vadd.f32 %v102, %v979
    %v984 = vadd.f32 %v103, %v980
    %v985 = vadd.f32 %v104, %v981
    %v986 = vadd.f32 %v105, %v982
    %987 = vst [vmem:[#allocation11] sm:$0xff] %v983
    %988 = vst [vmem:[#allocation11 + $0x8] sm:$0xff] %v984
    %989 = vst [vmem:[#allocation11 + $0x10] sm:$0xff] %v985
    %990 = vst [vmem:[#allocation11 + $0x18] sm:$0xff] %v986
    // Predicated region
    $region58: #{tpu_custom_call.1} parent=1 // pred_check
      _
    $region59: #{tpu_custom_call.1} parent=1 // pred_check_branch
      %992 = sbr.rel (0) target = $region61
    $region60: #{tpu_custom_call.1} parent=1 // pred_region
      %s994 = ssub.s32 512, 512
      %995 = vsyncadd [#allocation4], %s994
      %s996 = sshll.u32 [#allocation11], 4
      %s997 = int_to_ptr.vmem [resolvable:$true] %s996
      %1002 = dma.vmem_to_hbm [thread:$0]  %s997, 512, %s9, [#allocation4], 128, 128, 8
    $region61: #{tpu_custom_call.1} parent=1 // pred_fallthru
      _
    // Predicated region
    $region62: #{tpu_custom_call.1} parent=1 // pred_check
      _
    $region63: #{tpu_custom_call.1} parent=1 // pred_check_branch
      %1004 = sbr.rel (0) target = $region65
    $region64: #{tpu_custom_call.1} parent=1 // pred_region
      %1005 = dma.done [#allocation4], 512
    $region65: #{tpu_custom_call.1} parent=1 // pred_fallthru
      _
    %1006 = vsyncpa [#allocation3], 1
    %1007 = vsyncpa [#allocation6], 1
    %1008 = vsyncpa [#allocation9], 1
    %1009 = vsyncpa [#allocation4], 1

</llo_original>
